<compile_context>
chip_gen: v6e
topology: v6e:2x2x1
jax: 0.10.0
libtpu: 0.0.40
codegen_flags: <defaults>
</compile_context>

<pallas_src>
import jax
import jax.numpy as jnp
from jax.experimental import pallas as pl
from jax.experimental.pallas import tpu as pltpu


def _residual_block_kernel(x_ref, bw1_ref, b1_ref, bw2_ref, b2_ref,
                           out_ref, xp_ref, hp_ref):
    """One image per grid step.

    x_ref   : (H, W*Cin)  bf16   unpadded input slab
    bw*_ref : (3, W*C, W*C) bf16 banded, BN-folded conv weights (one per ky)
    b*_ref  : (1, W*Cout) f32    BN-folded bias, tiled across width
    out_ref : (H, W*Cout) f32
    xp_ref  : (H+2, W*Cin)  f32  row-halo scratch for the input
    hp_ref  : (H+2, W*Cout) f32  row-halo scratch for the intermediate
    """
    H, WCo = out_ref.shape
    WCi = x_ref.shape[1]

    # Zero only the two halo rows (cheap, done every step so grid iterations
    # stay independent -> "parallel" batch axis is safe on multi-core chips).
    # The interior rows [1:H+1] are fully overwritten below every step.
    xp_ref[0:1, :] = jnp.zeros((1, WCi), jnp.float32)
    xp_ref[H + 1:H + 2, :] = jnp.zeros((1, WCi), jnp.float32)
    hp_ref[0:1, :] = jnp.zeros((1, WCo), jnp.float32)
    hp_ref[H + 1:H + 2, :] = jnp.zeros((1, WCo), jnp.float32)

    # Stage the (unpadded, bf16) input into the row-padded scratch.
    xp_ref[1:H + 1, :] = x_ref[...].astype(jnp.float32)

    # ---- conv1 (3x3, stride 1, SAME) + folded BN1: 3 banded matmuls --------
    # Column halo / kx taps are folded into bw1, so each ky contributes one
    # (H, W*Cin) @ (W*Cin, W*Cout) bf16 matmul with f32 accumulation.
    acc1 = jnp.zeros((H, WCo), jnp.float32)
    for ky in range(3):  # static unroll
        a = xp_ref[ky:ky + H, :].astype(jnp.bfloat16)
        acc1 = acc1 + jnp.dot(a, bw1_ref[ky], preferred_element_type=jnp.float32)
    h = jnp.maximum(acc1 + b1_ref[...], 0.0)
    # dropout1: p=0.0 (module default) / eval mode -> identity
    # TODO(synk): training-mode dropout (p>0) not implemented; inference semantics.

    # Stage the intermediate (only its 2 halo rows were zeroed above).
    hp_ref[1:H + 1, :] = h

    # ---- conv2 (3x3, stride 1, SAME) + folded BN2 ---------------------------
    acc2 = jnp.zeros((H, WCo), jnp.float32)
    for ky in range(3):
        a = hp_ref[ky:ky + H, :].astype(jnp.bfloat16)
        acc2 = acc2 + jnp.dot(a, bw2_ref[ky], preferred_element_type=jnp.float32)
    # dropout2 -> identity (inference)

    # ---- identity residual (stride=1, downsample=None => Cin == Cout) ------
    # Reuse the already-staged input interior as the residual (no re-slice of
    # a separate padded tensor).
    res = xp_ref[1:H + 1, :]
    out_ref[...] = jnp.maximum(acc2 + b2_ref[...] + res, 0.0)


def residual_block(x_nhwc, bw1, b1, bw2, b2):
    """x_nhwc: (B,H,W,Cin) f32.  bw*: (3, W*C, W*C) bf16 banded weights.
    b*: (1, W*Cout) f32 tiled biases.  Returns (B,H,W,Cout) f32."""
    B, H, W, Cin = x_nhwc.shape
    WCi = W * Cin
    WCo = bw1.shape[-1]
    Cout = WCo // W
    assert Cin == Cout, "identity shortcut requires Cin == Cout"

    # Free (row-major view) reshape to the lane-dense 2-D layout; bf16 halves
    # the input DMA bytes.  No jnp.pad: the halo is handled inside the kernel.
    x2 = x_nhwc.reshape(B * H, WCi).astype(jnp.bfloat16)

    out2 = pl.pallas_call(
        _residual_block_kernel,
        out_shape=jax.ShapeDtypeStruct((B * H, WCo), jnp.float32),
        grid_spec=pltpu.PrefetchScalarGridSpec(
            num_scalar_prefetch=0,
            grid=(B,),
            in_specs=[
                pl.BlockSpec((H, WCi), lambda b: (b, 0)),          # input slab
                pl.BlockSpec((3, WCi, WCo), lambda b: (0, 0, 0)),  # banded W1
                pl.BlockSpec((1, WCo), lambda b: (0, 0)),          # bias1
                pl.BlockSpec((3, WCo, WCo), lambda b: (0, 0, 0)),  # banded W2
                pl.BlockSpec((1, WCo), lambda b: (0, 0)),          # bias2
            ],
            out_specs=pl.BlockSpec((H, WCo), lambda b: (b, 0)),    # lane-dense out
            scratch_shapes=[
                pltpu.VMEM((H + 2, WCi), jnp.float32),  # row-halo input scratch
                pltpu.VMEM((H + 2, WCo), jnp.float32),  # row-halo intermediate
            ],
        ),
        compiler_params=pltpu.CompilerParams(
            dimension_semantics=("parallel",),
            vmem_limit_bytes=32 * 1024 * 1024,
        ),
    )(x2, bw1, b1, bw2, b2)

    return out2.reshape(B, H, W, Cout)


# --------------------- parameter setup (plain JAX glue) ----------------------

def fold_conv_bn(w_oihw, b, gamma, beta, mean, var, eps=1e-5):
    """Fold Conv2d(bias) + BatchNorm2d (inference) -> HWIO weight + bias."""
    scale = gamma / jnp.sqrt(var + eps)                       # (Cout,)
    w_hwio = jnp.transpose(w_oihw, (2, 3, 1, 0)) * scale[None, None, None, :]
    b_eff = (b - mean) * scale + beta
    return w_hwio, b_eff                                      # (3,3,Cin,Cout), (Cout,)


def prepare_block_params(w_hwio, b_eff, W):
    """Quantize taps to bf16 and build banded (3, W*Cin, W*Cout) weights.

    Banding folds the kx taps and the width dimension into the matmul
    contraction; out-of-range column taps are omitted, which implements the
    zero column-padding of a SAME conv (so the kernel needs no column halo).
    """
    w_q = w_hwio.astype(jnp.bfloat16).astype(jnp.float32)     # exact bf16 values
    _, _, cin, cout = w_q.shape
    # E[kx, src, w] = 1 iff src == w + kx - 1  (valid column tap placement)
    E = jnp.stack([jnp.eye(W, k=1 - kx, dtype=jnp.float32) for kx in range(3)])
    bw = jnp.einsum('xsw,yxio->ysiwo', E, w_q).reshape(3, W * cin, W * cout)
    b_tiled = jnp.tile(b_eff, W).reshape(1, W * cout).astype(jnp.float32)
    return bw.astype(jnp.bfloat16), b_tiled, w_q


def init_raw_params(key, cin, cout):
    ks = jax.random.split(key, 12)
    conv1 = (0.1 * jax.random.normal(ks[0], (cout, cin, 3, 3), jnp.float32),
             0.1 * jax.random.normal(ks[1], (cout,), jnp.float32),
             1.0 + 0.1 * jax.random.normal(ks[2], (cout,), jnp.float32),
             0.1 * jax.random.normal(ks[3], (cout,), jnp.float32),
             0.1 * jax.random.normal(ks[4], (cout,), jnp.float32),
             0.5 + jnp.abs(jax.random.normal(ks[5], (cout,), jnp.float32)))
    conv2 = (0.1 * jax.random.normal(ks[6], (cout, cout, 3, 3), jnp.float32),
             0.1 * jax.random.normal(ks[7], (cout,), jnp.float32),
             1.0 + 0.1 * jax.random.normal(ks[8], (cout,), jnp.float32),
             0.1 * jax.random.normal(ks[9], (cout,), jnp.float32),
             0.1 * jax.random.normal(ks[10], (cout,), jnp.float32),
             0.5 + jnp.abs(jax.random.normal(ks[11], (cout,), jnp.float32)))
    return conv1, conv2


def ref_forward(x, w1, b1, w2, b2, quantize_intermediate):
    """Pure-JAX reference (lax conv, f32 HIGHEST precision)."""
    dn = ('NHWC', 'HWIO', 'NHWC')
    hp = jax.lax.Precision.HIGHEST
    h = jax.lax.conv_general_dilated(x, w1, (1, 1), 'SAME',
                                     dimension_numbers=dn, precision=hp)
    h = jnp.maximum(h + b1[None, None, None, :], 0.0)
    if quantize_intermediate:   # mirror the kernel's bf16 matmul operand
        h = h.astype(jnp.bfloat16).astype(jnp.float32)
    o = jax.lax.conv_general_dilated(h, w2, (1, 1), 'SAME',
                                     dimension_numbers=dn, precision=hp)
    return jnp.maximum(o + b2[None, None, None, :] + x, 0.0)


if __name__ == "__main__":
    B, Cin, H, W = 2, 4, 16, 16
    Cout = Cin  # stride=1, downsample=None => identity shortcut requires Cin == Cout

    key = jax.random.PRNGKey(0)
    k_x, k_p = jax.random.split(key)
    x_nchw = jax.random.normal(k_x, (B, Cin, H, W), jnp.float32)  # PyTorch layout
    x_nhwc = jnp.transpose(x_nchw, (0, 2, 3, 1))                  # kernel layout

    raw1, raw2 = init_raw_params(k_p, Cin, Cout)
    w1_hwio, b1_vec = fold_conv_bn(*raw1)
    w2_hwio, b2_vec = fold_conv_bn(*raw2)
    bw1, b1_t, w1_q = prepare_block_params(w1_hwio, b1_vec, W)
    bw2, b2_t, w2_q = prepare_block_params(w2_hwio, b2_vec, W)

    out_nhwc = residual_block(x_nhwc, bw1, b1_t, bw2, b2_t)
    out_nchw = jnp.transpose(out_nhwc, (0, 3, 1, 2))              # back to NCHW
    jax.block_until_ready(out_nchw)
    assert out_nchw.shape == (B, Cout, H, W)

    # Check 1: exact-numerics reference (same bf16-quantized operands,
    # f32 accumulation) -> tight tolerance.
    x_q = x_nhwc.astype(jnp.bfloat16).astype(jnp.float32)
    ref_q = ref_forward(x_q, w1_q, b1_vec, w2_q, b2_vec, quantize_intermediate=True)
    assert jnp.allclose(out_nhwc, ref_q, atol=1e-3, rtol=1e-3), "mismatch vs bf16-quantized reference"

    # Check 2: loose sanity check against full-f32 module semantics
    # (bf16 operand quantization is the only difference).
    ref_f32 = ref_forward(x_nhwc, w1_hwio, b1_vec, w2_hwio, b2_vec,
                          quantize_intermediate=False)
    assert jnp.allclose(out_nhwc, ref_f32, atol=5e-2, rtol=5e-2), "mismatch vs f32 reference"

    print("KERNEL_OK")
</pallas_src>

<mosaic_0001>
module attributes {stable_mosaic.version = 11 : i64} {
  func.func @_residual_block_kernel(%arg0: i32, %arg1: memref<16x64xbf16, #tpu.memory_space<vmem>>, %arg2: memref<3x64x64xbf16, #tpu.memory_space<vmem>>, %arg3: memref<1x64xf32, #tpu.memory_space<vmem>>, %arg4: memref<3x64x64xbf16, #tpu.memory_space<vmem>>, %arg5: memref<1x64xf32, #tpu.memory_space<vmem>>, %arg6: memref<16x64xf32, #tpu.memory_space<vmem>>, %arg7: memref<18x64xf32, #tpu.memory_space<vmem>>, %arg8: memref<18x64xf32, #tpu.memory_space<vmem>>) attributes {dimension_semantics = [#tpu.dimension_semantics<parallel>], iteration_bounds = array<i64: 2>, scalar_prefetch = 0 : i64, scratch_operands = 2 : i64, tpu.core_type = #tpu.core_type<tc>, window_params = [{transform_indices = @transform_0, window_bounds = array<i64: 16, 64>}, {pipeline_mode = #tpu.pipeline_mode<synchronous>, transform_indices = @transform_1, window_bounds = array<i64: 3, 64, 64>}, {pipeline_mode = #tpu.pipeline_mode<synchronous>, transform_indices = @transform_2, window_bounds = array<i64: 1, 64>}, {pipeline_mode = #tpu.pipeline_mode<synchronous>, transform_indices = @transform_3, window_bounds = array<i64: 3, 64, 64>}, {pipeline_mode = #tpu.pipeline_mode<synchronous>, transform_indices = @transform_4, window_bounds = array<i64: 1, 64>}, {transform_indices = @transform_5, window_bounds = array<i64: 16, 64>}]} {
    %cst = arith.constant 0.000000e+00 : f32
    %0 = vector.broadcast %cst : f32 to vector<1x64xf32>
    %c0 = arith.constant 0 : index
    %c0_0 = arith.constant 0 : index
    %1 = vector.load %arg7[%c0, %c0_0] : memref<18x64xf32, #tpu.memory_space<vmem>>, vector<1x64xf32>
    tpu.vector_store %arg7[%c0, %c0_0], %0 {strides = array<i32>} : memref<18x64xf32, #tpu.memory_space<vmem>>, vector<1x64xf32>,
    %cst_1 = arith.constant 0.000000e+00 : f32
    %2 = vector.broadcast %cst_1 : f32 to vector<1x64xf32>
    %c17 = arith.constant 17 : index
    %c0_2 = arith.constant 0 : index
    %3 = vector.load %arg7[%c17, %c0_2] : memref<18x64xf32, #tpu.memory_space<vmem>>, vector<1x64xf32>
    tpu.vector_store %arg7[%c17, %c0_2], %2 {strides = array<i32>} : memref<18x64xf32, #tpu.memory_space<vmem>>, vector<1x64xf32>,
    %cst_3 = arith.constant 0.000000e+00 : f32
    %4 = vector.broadcast %cst_3 : f32 to vector<1x64xf32>
    %c0_4 = arith.constant 0 : index
    %c0_5 = arith.constant 0 : index
    %5 = vector.load %arg8[%c0_4, %c0_5] : memref<18x64xf32, #tpu.memory_space<vmem>>, vector<1x64xf32>
    tpu.vector_store %arg8[%c0_4, %c0_5], %4 {strides = array<i32>} : memref<18x64xf32, #tpu.memory_space<vmem>>, vector<1x64xf32>,
    %cst_6 = arith.constant 0.000000e+00 : f32
    %6 = vector.broadcast %cst_6 : f32 to vector<1x64xf32>
    %c17_7 = arith.constant 17 : index
    %c0_8 = arith.constant 0 : index
    %7 = vector.load %arg8[%c17_7, %c0_8] : memref<18x64xf32, #tpu.memory_space<vmem>>, vector<1x64xf32>
    tpu.vector_store %arg8[%c17_7, %c0_8], %6 {strides = array<i32>} : memref<18x64xf32, #tpu.memory_space<vmem>>, vector<1x64xf32>,
    %c0_9 = arith.constant 0 : index
    %c0_10 = arith.constant 0 : index
    %8 = vector.load %arg1[%c0_9, %c0_10] : memref<16x64xbf16, #tpu.memory_space<vmem>>, vector<16x64xbf16>
    %9 = arith.extf %8 : vector<16x64xbf16> to vector<16x64xf32>
    %c1 = arith.constant 1 : index
    %c0_11 = arith.constant 0 : index
    %10 = vector.load %arg7[%c1, %c0_11] : memref<18x64xf32, #tpu.memory_space<vmem>>, vector<16x64xf32>
    tpu.vector_store %arg7[%c1, %c0_11], %9 {strides = array<i32>} : memref<18x64xf32, #tpu.memory_space<vmem>>, vector<16x64xf32>,
    %cst_12 = arith.constant 0.000000e+00 : f32
    %11 = vector.broadcast %cst_12 : f32 to vector<16x64xf32>
    %c0_13 = arith.constant 0 : index
    %c0_14 = arith.constant 0 : index
    %12 = vector.load %arg7[%c0_13, %c0_14] : memref<18x64xf32, #tpu.memory_space<vmem>>, vector<16x64xf32>
    %13 = arith.truncf %12 : vector<16x64xf32> to vector<16x64xbf16>
    %c0_15 = arith.constant 0 : index
    %c0_16 = arith.constant 0 : index
    %c0_17 = arith.constant 0 : index
    %14 = vector.load %arg2[%c0_15, %c0_16, %c0_17] : memref<3x64x64xbf16, #tpu.memory_space<vmem>>, vector<1x64x64xbf16>
    %15 = vector.shape_cast %14 : vector<1x64x64xbf16> to vector<64x64xbf16>
    %cst_18 = arith.constant dense<0.000000e+00> : vector<16x64xf32>
    %16 = tpu.matmul %13, %15, %cst_18 {dimension_numbers = #tpu.dot_dimension_numbers<[1], [0], [0], [1], [0, 0, 1, 1], [], []>} : vector<16x64xbf16>, vector<64x64xbf16>, vector<16x64xf32> -> vector<16x64xf32>
    %17 = arith.addf %11, %16 : vector<16x64xf32>
    %c1_19 = arith.constant 1 : index
    %c0_20 = arith.constant 0 : index
    %18 = vector.load %arg7[%c1_19, %c0_20] : memref<18x64xf32, #tpu.memory_space<vmem>>, vector<16x64xf32>
    %19 = arith.truncf %18 : vector<16x64xf32> to vector<16x64xbf16>
    %c1_21 = arith.constant 1 : index
    %c0_22 = arith.constant 0 : index
    %c0_23 = arith.constant 0 : index
    %20 = vector.load %arg2[%c1_21, %c0_22, %c0_23] : memref<3x64x64xbf16, #tpu.memory_space<vmem>>, vector<1x64x64xbf16>
    %21 = vector.shape_cast %20 : vector<1x64x64xbf16> to vector<64x64xbf16>
    %cst_24 = arith.constant dense<0.000000e+00> : vector<16x64xf32>
    %22 = tpu.matmul %19, %21, %cst_24 {dimension_numbers = #tpu.dot_dimension_numbers<[1], [0], [0], [1], [0, 0, 1, 1], [], []>} : vector<16x64xbf16>, vector<64x64xbf16>, vector<16x64xf32> -> vector<16x64xf32>
    %23 = arith.addf %17, %22 : vector<16x64xf32>
    %c2 = arith.constant 2 : index
    %c0_25 = arith.constant 0 : index
    %24 = vector.load %arg7[%c2, %c0_25] : memref<18x64xf32, #tpu.memory_space<vmem>>, vector<16x64xf32>
    %25 = arith.truncf %24 : vector<16x64xf32> to vector<16x64xbf16>
    %c2_26 = arith.constant 2 : index
    %c0_27 = arith.constant 0 : index
    %c0_28 = arith.constant 0 : index
    %26 = vector.load %arg2[%c2_26, %c0_27, %c0_28] : memref<3x64x64xbf16, #tpu.memory_space<vmem>>, vector<1x64x64xbf16>
    %27 = vector.shape_cast %26 : vector<1x64x64xbf16> to vector<64x64xbf16>
    %cst_29 = arith.constant dense<0.000000e+00> : vector<16x64xf32>
    %28 = tpu.matmul %25, %27, %cst_29 {dimension_numbers = #tpu.dot_dimension_numbers<[1], [0], [0], [1], [0, 0, 1, 1], [], []>} : vector<16x64xbf16>, vector<64x64xbf16>, vector<16x64xf32> -> vector<16x64xf32>
    %29 = arith.addf %23, %28 : vector<16x64xf32>
    %c0_30 = arith.constant 0 : index
    %c0_31 = arith.constant 0 : index
    %30 = vector.load %arg3[%c0_30, %c0_31] : memref<1x64xf32, #tpu.memory_space<vmem>>, vector<1x64xf32>
    %31 = vector.broadcast %30 : vector<1x64xf32> to vector<16x64xf32>
    %32 = arith.addf %29, %31 : vector<16x64xf32>
    %cst_32 = arith.constant 0.000000e+00 : f32
    %33 = vector.broadcast %cst_32 : f32 to vector<16x64xf32>
    %34 = arith.maximumf %32, %33 : vector<16x64xf32>
    %c1_33 = arith.constant 1 : index
    %c0_34 = arith.constant 0 : index
    %35 = vector.load %arg8[%c1_33, %c0_34] : memref<18x64xf32, #tpu.memory_space<vmem>>, vector<16x64xf32>
    tpu.vector_store %arg8[%c1_33, %c0_34], %34 {strides = array<i32>} : memref<18x64xf32, #tpu.memory_space<vmem>>, vector<16x64xf32>,
    %cst_35 = arith.constant 0.000000e+00 : f32
    %36 = vector.broadcast %cst_35 : f32 to vector<16x64xf32>
    %c0_36 = arith.constant 0 : index
    %c0_37 = arith.constant 0 : index
    %37 = vector.load %arg8[%c0_36, %c0_37] : memref<18x64xf32, #tpu.memory_space<vmem>>, vector<16x64xf32>
    %38 = arith.truncf %37 : vector<16x64xf32> to vector<16x64xbf16>
    %c0_38 = arith.constant 0 : index
    %c0_39 = arith.constant 0 : index
    %c0_40 = arith.constant 0 : index
    %39 = vector.load %arg4[%c0_38, %c0_39, %c0_40] : memref<3x64x64xbf16, #tpu.memory_space<vmem>>, vector<1x64x64xbf16>
    %40 = vector.shape_cast %39 : vector<1x64x64xbf16> to vector<64x64xbf16>
    %cst_41 = arith.constant dense<0.000000e+00> : vector<16x64xf32>
    %41 = tpu.matmul %38, %40, %cst_41 {dimension_numbers = #tpu.dot_dimension_numbers<[1], [0], [0], [1], [0, 0, 1, 1], [], []>} : vector<16x64xbf16>, vector<64x64xbf16>, vector<16x64xf32> -> vector<16x64xf32>
    %42 = arith.addf %36, %41 : vector<16x64xf32>
    %c1_42 = arith.constant 1 : index
    %c0_43 = arith.constant 0 : index
    %43 = vector.load %arg8[%c1_42, %c0_43] : memref<18x64xf32, #tpu.memory_space<vmem>>, vector<16x64xf32>
    %44 = arith.truncf %43 : vector<16x64xf32> to vector<16x64xbf16>
    %c1_44 = arith.constant 1 : index
    %c0_45 = arith.constant 0 : index
    %c0_46 = arith.constant 0 : index
    %45 = vector.load %arg4[%c1_44, %c0_45, %c0_46] : memref<3x64x64xbf16, #tpu.memory_space<vmem>>, vector<1x64x64xbf16>
    %46 = vector.shape_cast %45 : vector<1x64x64xbf16> to vector<64x64xbf16>
    %cst_47 = arith.constant dense<0.000000e+00> : vector<16x64xf32>
    %47 = tpu.matmul %44, %46, %cst_47 {dimension_numbers = #tpu.dot_dimension_numbers<[1], [0], [0], [1], [0, 0, 1, 1], [], []>} : vector<16x64xbf16>, vector<64x64xbf16>, vector<16x64xf32> -> vector<16x64xf32>
    %48 = arith.addf %42, %47 : vector<16x64xf32>
    %c2_48 = arith.constant 2 : index
    %c0_49 = arith.constant 0 : index
    %49 = vector.load %arg8[%c2_48, %c0_49] : memref<18x64xf32, #tpu.memory_space<vmem>>, vector<16x64xf32>
    %50 = arith.truncf %49 : vector<16x64xf32> to vector<16x64xbf16>
    %c2_50 = arith.constant 2 : index
    %c0_51 = arith.constant 0 : index
    %c0_52 = arith.constant 0 : index
    %51 = vector.load %arg4[%c2_50, %c0_51, %c0_52] : memref<3x64x64xbf16, #tpu.memory_space<vmem>>, vector<1x64x64xbf16>
    %52 = vector.shape_cast %51 : vector<1x64x64xbf16> to vector<64x64xbf16>
    %cst_53 = arith.constant dense<0.000000e+00> : vector<16x64xf32>
    %53 = tpu.matmul %50, %52, %cst_53 {dimension_numbers = #tpu.dot_dimension_numbers<[1], [0], [0], [1], [0, 0, 1, 1], [], []>} : vector<16x64xbf16>, vector<64x64xbf16>, vector<16x64xf32> -> vector<16x64xf32>
    %54 = arith.addf %48, %53 : vector<16x64xf32>
    %c1_54 = arith.constant 1 : index
    %c0_55 = arith.constant 0 : index
    %55 = vector.load %arg7[%c1_54, %c0_55] : memref<18x64xf32, #tpu.memory_space<vmem>>, vector<16x64xf32>
    %c0_56 = arith.constant 0 : index
    %c0_57 = arith.constant 0 : index
    %56 = vector.load %arg5[%c0_56, %c0_57] : memref<1x64xf32, #tpu.memory_space<vmem>>, vector<1x64xf32>
    %57 = vector.broadcast %56 : vector<1x64xf32> to vector<16x64xf32>
    %58 = arith.addf %54, %57 : vector<16x64xf32>
    %59 = arith.addf %58, %55 : vector<16x64xf32>
    %cst_58 = arith.constant 0.000000e+00 : f32
    %60 = vector.broadcast %cst_58 : f32 to vector<16x64xf32>
    %61 = arith.maximumf %59, %60 : vector<16x64xf32>
    %c0_59 = arith.constant 0 : index
    %c0_60 = arith.constant 0 : index
    %62 = vector.load %arg6[%c0_59, %c0_60] : memref<16x64xf32, #tpu.memory_space<vmem>>, vector<16x64xf32>
    tpu.vector_store %arg6[%c0_59, %c0_60], %61 {strides = array<i32>} : memref<16x64xf32, #tpu.memory_space<vmem>>, vector<16x64xf32>,
    return
  }
  func.func @transform_0(%arg0: i32) -> (i32, i32) {
    %c0_i32 = arith.constant 0 : i32
    %c0_i32_0 = arith.constant 0 : i32
    return %arg0, %c0_i32 : i32, i32
  }
  func.func @transform_1(%arg0: i32) -> (i32, i32, i32) {
    %c0_i32 = arith.constant 0 : i32
    %c0_i32_0 = arith.constant 0 : i32
    %c0_i32_1 = arith.constant 0 : i32
    %c0_i32_2 = arith.constant 0 : i32
    return %c0_i32, %c0_i32_0, %c0_i32_1 : i32, i32, i32
  }
  func.func @transform_2(%arg0: i32) -> (i32, i32) {
    %c0_i32 = arith.constant 0 : i32
    %c0_i32_0 = arith.constant 0 : i32
    %c0_i32_1 = arith.constant 0 : i32
    return %c0_i32, %c0_i32_0 : i32, i32
  }
  func.func @transform_3(%arg0: i32) -> (i32, i32, i32) {
    %c0_i32 = arith.constant 0 : i32
    %c0_i32_0 = arith.constant 0 : i32
    %c0_i32_1 = arith.constant 0 : i32
    %c0_i32_2 = arith.constant 0 : i32
    return %c0_i32, %c0_i32_0, %c0_i32_1 : i32, i32, i32
  }
  func.func @transform_4(%arg0: i32) -> (i32, i32) {
    %c0_i32 = arith.constant 0 : i32
    %c0_i32_0 = arith.constant 0 : i32
    %c0_i32_1 = arith.constant 0 : i32
    return %c0_i32, %c0_i32_0 : i32, i32
  }
  func.func @transform_5(%arg0: i32) -> (i32, i32) {
    %c0_i32 = arith.constant 0 : i32
    %c0_i32_0 = arith.constant 0 : i32
    return %arg0, %c0_i32 : i32, i32
  }
}

</mosaic_0001>

<llo_original>
// kernel: tpu_custom_call.1
$region0: #{tpu_custom_call.1}
  #allocation0 [shape = 'u32[]', space=smem, size = 0x4, offset = 0x4, fixed_abs, tag = 'smem constant byte address 0x4 - core index']
  #allocation1 [shape = 'u32[144,128]{1,0:T(1,128)}', space=vmem, size = 0x12000, scoped, tag = 'internal scratch']
  #allocation2 [shape = 'f32[18,64]{1,0:T(8,128)}', space=vmem, size = 0x3000, scoped, tag = 'scratch operand']
  #allocation3 [shape = 'f32[18,64]{1,0:T(8,128)}', space=vmem, size = 0x3000, scoped, tag = 'scratch operand']
  %s0 = inlined_call_operand.hbm [shape: bf16[32,64], index: 0, kind: input, shape index: {}]
  %s1 = inlined_call_operand.hbm [shape: bf16[3,64,64], index: 1, kind: input, shape index: {}]
  %s2 = inlined_call_operand.vmem [shape: f32[1,64], index: 2, kind: input, shape index: {}]
  %s3 = inlined_call_operand.hbm [shape: bf16[3,64,64], index: 3, kind: input, shape index: {}]
  %s4 = inlined_call_operand.vmem [shape: f32[1,64], index: 4, kind: input, shape index: {}]
  %s5 = inlined_call_operand.hbm [shape: f32[32,64], index: 5, kind: output, shape index: {}]
  %s6 = sld [smem:[#allocation0]]
  $region65: #{tpu_custom_call.1} parent=0
    _
  %s8 = ssub.s32 1, %s6
  %s9 = scalar_select 0, %s8, %s6
  $region1: #{tpu_custom_call.1} parent=0
    #allocation4 [shape = 'u8[8192]{0}', space=vmem, size = 0x2000, scoped, tag = 'input window, operand 0']
    #allocation5 [shape = 's32[2]{0}', space=sflag, size = 0x8, scoped, tag = 'scoped memory for tpu_custom_call.1']
    #allocation6 [shape = 's32[2]{0}', space=sflag, size = 0x8, scoped, tag = 'scoped memory for tpu_custom_call.1']
    #allocation7 [shape = 'u8[49152]{0}', space=vmem, size = 0xc000, scoped, tag = 'input window, operand 1, single buffered']
    #allocation8 [shape = 's32[1]{0}', space=sflag, size = 0x4, scoped, tag = 'scoped memory for tpu_custom_call.1']
    #allocation9 [shape = 'u8[49152]{0}', space=vmem, size = 0xc000, scoped, tag = 'input window, operand 3, single buffered']
    #allocation10 [shape = 'u8[16384]{0}', space=vmem, size = 0x4000, scoped, tag = 'output window, operand 0']
    %10 = vsyncpa [#allocation5], 0
    %s11 = scalar_lea.sflag [#allocation5], 1
    %12 = vsyncpa %s11, 0
    %13 = vsyncpa [#allocation8], 0
    %14 = vsyncpa [#allocation6], 0
    %s15 = scalar_lea.sflag [#allocation6], 1
    %16 = vsyncpa %s15, 0
    loop: start=0, step=1, limit=4
    $region2: #{tpu_custom_call.1} parent=1 // loop_pre_header
      _
    $region3: #{tpu_custom_call.1} parent=1 // loop_header
      %s18 = sphi 0, %s22
      %p19 = scmp.ge.s32.totalorder %s18, 4
      %s28 = sphi 0, %s30
      %s31 = sphi 0, %s28
      %s32 = sphi 0, %s31
      %s48 = sphi 0, %s32
      %s52 = sphi 0, %s52
      %s54 = sphi 0, %s52
      %s55 = sphi 0, %s54
      %s69 = sphi 0, %s55
      %s73 = sphi 0, %s73
      %s75 = sphi 0, %s73
      %s76 = sphi 0, %s75
      %s90 = sphi 0, %s76
      %s94 = sphi 0, %s94
      %s96 = sphi 0, %s94
      %s97 = sphi 0, %s96
      %s111 = sphi 0, %s97
      %s115 = sphi 0, %s115
      %s117 = sphi 0, %s115
      %s118 = sphi 0, %s117
      %s132 = sphi 0, %s118
      %s138 = sphi 0, %s140
      %s141 = sphi 0, %s138
      %s142 = sphi 0, %s141
      %s158 = sphi 0, %s142
    $region4: #{tpu_custom_call.1} parent=1 // loop_header_branch
      %21 = sbr.rel (%p19) target = $region8
    $region5: #{tpu_custom_call.1} parent=1 // loop_body
      %s23 = ssub.s32 %s18, 1
      %s24 = ssub.s32 %s18, 2
      %s25 = sadd.s32 %s18, 1
      %s26 = ssub.s32 %s18, %s25
      %p27 = scmp.eq.s32.totalorder %s26, 0
      %s29 = sadd.s32 %s28, 1
      %s30 = scalar_select %p27, %s28, %s29
      %p33 = pneg %p27
      %p34 = scmp.eq.s32.totalorder %s18, 1
      %p35 = por %p33, %p34
      %p36 = scmp.ne.s32.totalorder %s28, %s31
      %p37 = scmp.eq.s32.totalorder %s18, 0
      %p38 = por %p36, %p37
      %p39 = scmp.ne.s32.totalorder %s28, %s31
      %p40 = scmp.eq.s32.totalorder %s23, 1
      %p41 = por %p39, %p40
      %p42 = scmp.ne.s32.totalorder %s31, %s32
      %p43 = scmp.eq.s32.totalorder %s23, 0
      %p44 = por %p42, %p43
      %p45 = scmp.ne.s32.totalorder %s31, %s32
      %p46 = scmp.eq.s32.totalorder %s24, 1
      %p47 = por %p45, %p46
      %p49 = scmp.ne.s32.totalorder %s32, %s48
      %p50 = scmp.eq.s32.totalorder %s24, 0
      %p51 = por %p49, %p50
      %s53 = sadd.s32 %s52, 1
      %p56 = scmp.eq.s32.totalorder %s18, 1
      %p57 = scmp.ne.s32.totalorder %s52, %s54
      %p58 = scmp.eq.s32.totalorder %s18, 0
      %p59 = por %p57, %p58
      %p60 = scmp.ne.s32.totalorder %s52, %s54
      %p61 = scmp.eq.s32.totalorder %s23, 1
      %p62 = por %p60, %p61
      %p63 = scmp.ne.s32.totalorder %s54, %s55
      %p64 = scmp.eq.s32.totalorder %s23, 0
      %p65 = por %p63, %p64
      %p66 = scmp.ne.s32.totalorder %s54, %s55
      %p67 = scmp.eq.s32.totalorder %s24, 1
      %p68 = por %p66, %p67
      %p70 = scmp.ne.s32.totalorder %s55, %s69
      %p71 = scmp.eq.s32.totalorder %s24, 0
      %p72 = por %p70, %p71
      %s74 = sadd.s32 %s73, 1
      %p77 = scmp.eq.s32.totalorder %s18, 1
      %p78 = scmp.ne.s32.totalorder %s73, %s75
      %p79 = scmp.eq.s32.totalorder %s18, 0
      %p80 = por %p78, %p79
      %p81 = scmp.ne.s32.totalorder %s73, %s75
      %p82 = scmp.eq.s32.totalorder %s23, 1
      %p83 = por %p81, %p82
      %p84 = scmp.ne.s32.totalorder %s75, %s76
      %p85 = scmp.eq.s32.totalorder %s23, 0
      %p86 = por %p84, %p85
      %p87 = scmp.ne.s32.totalorder %s75, %s76
      %p88 = scmp.eq.s32.totalorder %s24, 1
      %p89 = por %p87, %p88
      %p91 = scmp.ne.s32.totalorder %s76, %s90
      %p92 = scmp.eq.s32.totalorder %s24, 0
      %p93 = por %p91, %p92
      %s95 = sadd.s32 %s94, 1
      %p98 = scmp.eq.s32.totalorder %s18, 1
      %p99 = scmp.ne.s32.totalorder %s94, %s96
      %p100 = scmp.eq.s32.totalorder %s18, 0
      %p101 = por %p99, %p100
      %p102 = scmp.ne.s32.totalorder %s94, %s96
      %p103 = scmp.eq.s32.totalorder %s23, 1
      %p104 = por %p102, %p103
      %p105 = scmp.ne.s32.totalorder %s96, %s97
      %p106 = scmp.eq.s32.totalorder %s23, 0
      %p107 = por %p105, %p106
      %p108 = scmp.ne.s32.totalorder %s96, %s97
      %p109 = scmp.eq.s32.totalorder %s24, 1
      %p110 = por %p108, %p109
      %p112 = scmp.ne.s32.totalorder %s97, %s111
      %p113 = scmp.eq.s32.totalorder %s24, 0
      %p114 = por %p112, %p113
      %s116 = sadd.s32 %s115, 1
      %p119 = scmp.eq.s32.totalorder %s18, 1
      %p120 = scmp.ne.s32.totalorder %s115, %s117
      %p121 = scmp.eq.s32.totalorder %s18, 0
      %p122 = por %p120, %p121
      %p123 = scmp.ne.s32.totalorder %s115, %s117
      %p124 = scmp.eq.s32.totalorder %s23, 1
      %p125 = por %p123, %p124
      %p126 = scmp.ne.s32.totalorder %s117, %s118
      %p127 = scmp.eq.s32.totalorder %s23, 0
      %p128 = por %p126, %p127
      %p129 = scmp.ne.s32.totalorder %s117, %s118
      %p130 = scmp.eq.s32.totalorder %s24, 1
      %p131 = por %p129, %p130
      %p133 = scmp.ne.s32.totalorder %s118, %s132
      %p134 = scmp.eq.s32.totalorder %s24, 0
      %p135 = por %p133, %p134
      %s136 = ssub.s32 %s18, %s25
      %p137 = scmp.eq.s32.totalorder %s136, 0
      %s139 = sadd.s32 %s138, 1
      %s140 = scalar_select %p137, %s138, %s139
      %p143 = pneg %p137
      %p144 = scmp.eq.s32.totalorder %s18, 1
      %p145 = por %p143, %p144
      %p146 = scmp.ne.s32.totalorder %s138, %s141
      %p147 = scmp.eq.s32.totalorder %s18, 0
      %p148 = por %p146, %p147
      %p149 = scmp.ne.s32.totalorder %s138, %s141
      %p150 = scmp.eq.s32.totalorder %s23, 1
      %p151 = por %p149, %p150
      %p152 = scmp.ne.s32.totalorder %s141, %s142
      %p153 = scmp.eq.s32.totalorder %s23, 0
      %p154 = por %p152, %p153
      %p155 = scmp.ne.s32.totalorder %s141, %s142
      %p156 = scmp.eq.s32.totalorder %s24, 1
      %p157 = por %p155, %p156
      %p159 = scmp.ne.s32.totalorder %s142, %s158
      %p160 = scmp.eq.s32.totalorder %s24, 0
      %p161 = por %p159, %p160
      %p162 = scmp.le.s32.totalorder 1, %s18
      %p163 = scmp.lt.s32.totalorder %s18, 3
      %p164 = pnand %p162, %p163
      %p165 = pneg %p164
      // Predicated region
      $region9: #{tpu_custom_call.1} parent=5 // pred_check
        _
      $region10: #{tpu_custom_call.1} parent=5 // pred_check_branch
        %167 = sbr.rel (%p164) target = $region12
      $region11: #{tpu_custom_call.1} parent=5 // pred_region
        %s168 = ssub.s32 %s18, 1
        // Predicated region
        $region13: #{tpu_custom_call.1} parent=11 // pred_check
          %p169 = pneg %p65
        $region14: #{tpu_custom_call.1} parent=11 // pred_check_branch
          %171 = sbr.rel (%p169) target = $region16
        $region15: #{tpu_custom_call.1} parent=11 // pred_region
          %s173 = ssub.s32 1536, 1536
          %174 = vsyncadd [#allocation8], %s173
          %s175 = sshll.u32 [#allocation7], 4
          %s176 = int_to_ptr.vmem [resolvable:$true] %s175
          %181 = dma.hbm_to_vmem [thread:$0]  %s1, 1536, %s176, [#allocation8], 64, 64, 4
        $region16: #{tpu_custom_call.1} parent=11 // pred_fallthru
          _
        // Predicated region
        $region17: #{tpu_custom_call.1} parent=11 // pred_check
          %p182 = pneg %p86
        $region18: #{tpu_custom_call.1} parent=11 // pred_check_branch
          %184 = sbr.rel (%p182) target = $region20
        $region19: #{tpu_custom_call.1} parent=11 // pred_region
          _
        $region20: #{tpu_custom_call.1} parent=11 // pred_fallthru
          _
        // Predicated region
        $region21: #{tpu_custom_call.1} parent=11 // pred_check
          %p185 = pneg %p107
        $region22: #{tpu_custom_call.1} parent=11 // pred_check_branch
          %187 = sbr.rel (%p185) target = $region24
        $region23: #{tpu_custom_call.1} parent=11 // pred_region
          %s189 = ssub.s32 1536, 1536
          %190 = vsyncadd [#allocation8], %s189
          %s191 = sshll.u32 [#allocation9], 4
          %s192 = int_to_ptr.vmem [resolvable:$true] %s191
          %197 = dma.hbm_to_vmem [thread:$0]  %s3, 1536, %s192, [#allocation8], 64, 64, 4
        $region24: #{tpu_custom_call.1} parent=11 // pred_fallthru
          _
        // Predicated region
        $region25: #{tpu_custom_call.1} parent=11 // pred_check
          %p198 = pneg %p128
        $region26: #{tpu_custom_call.1} parent=11 // pred_check_branch
          %200 = sbr.rel (%p198) target = $region28
        $region27: #{tpu_custom_call.1} parent=11 // pred_region
          _
        $region28: #{tpu_custom_call.1} parent=11 // pred_fallthru
          _
      $region12: #{tpu_custom_call.1} parent=5 // pred_fallthru
        _
      %p201 = scmp.lt.s32.totalorder %s18, 2
      // Predicated region
      $region29: #{tpu_custom_call.1} parent=5 // pred_check
        %p202 = pneg %p201
      $region30: #{tpu_custom_call.1} parent=5 // pred_check_branch
        %204 = sbr.rel (%p202) target = $region32
      $region31: #{tpu_custom_call.1} parent=5 // pred_region
        // Predicated region
        $region33: #{tpu_custom_call.1} parent=31 // pred_check
          %p205 = pneg %p38
        $region34: #{tpu_custom_call.1} parent=31 // pred_check_branch
          %207 = sbr.rel (%p205) target = $region36
        $region35: #{tpu_custom_call.1} parent=31 // pred_region
          %s208 = sand.u32 %s28, 1
          %s209 = scalar_lea.sflag [#allocation5], %s208
          %s210 = sand.u32 %s28, 1
          %s211 = smul.addr %s210, 8
          %s212 = scalar_lea.vmem [#allocation4], %s211
          %s213 = smul.u32 2, %s18
          %s215 = ssub.s32 128, 128
          %216 = vsyncadd %s209, %s215
          %s217 = smul.addr %s213, 64
          %s218 = scalar_lea.hbm %s0, %s217
          %s219 = sshll.u32 %s212, 4
          %s220 = int_to_ptr.vmem [resolvable:$true] %s219
          %225 = dma.hbm_to_vmem [thread:$0]  %s218, 128, %s220, %s209, 64, 64, 4
        $region36: #{tpu_custom_call.1} parent=31 // pred_fallthru
          _
      $region32: #{tpu_custom_call.1} parent=5 // pred_fallthru
        _
      %p226 = scmp.le.s32.totalorder 1, %s18
      %p227 = scmp.lt.s32.totalorder %s18, 3
      %p228 = pnand %p226, %p227
      %p229 = pneg %p228
      // Predicated region
      $region37: #{tpu_custom_call.1} parent=5 // pred_check
        _
      $region38: #{tpu_custom_call.1} parent=5 // pred_check_branch
        %231 = sbr.rel (%p228) target = $region40
      $region39: #{tpu_custom_call.1} parent=5 // pred_region
        %s232 = ssub.s32 %s18, 1
        %s233 = sand.u32 %s31, 1
        %s234 = scalar_lea.sflag [#allocation5], %s233
        %s235 = sand.u32 %s31, 1
        %s236 = smul.addr %s235, 8
        %s237 = scalar_lea.vmem [#allocation4], %s236
        // Predicated region
        $region41: #{tpu_custom_call.1} parent=39 // pred_check
          %p238 = pneg %p44
        $region42: #{tpu_custom_call.1} parent=39 // pred_check_branch
          %240 = sbr.rel (%p238) target = $region44
        $region43: #{tpu_custom_call.1} parent=39 // pred_region
          %241 = dma.done %s234, 128
        $region44: #{tpu_custom_call.1} parent=39 // pred_fallthru
          _
        // Predicated region
        $region45: #{tpu_custom_call.1} parent=39 // pred_check
          %p242 = pneg %p65
        $region46: #{tpu_custom_call.1} parent=39 // pred_check_branch
          %244 = sbr.rel (%p242) target = $region48
        $region47: #{tpu_custom_call.1} parent=39 // pred_region
          %245 = dma.done [#allocation8], 1536
        $region48: #{tpu_custom_call.1} parent=39 // pred_fallthru
          _
        // Predicated region
        $region49: #{tpu_custom_call.1} parent=39 // pred_check
          %p246 = pneg %p107
        $region50: #{tpu_custom_call.1} parent=39 // pred_check_branch
          %248 = sbr.rel (%p246) target = $region52
        $region51: #{tpu_custom_call.1} parent=39 // pred_region
          %249 = dma.done [#allocation8], 1536
        $region52: #{tpu_custom_call.1} parent=39 // pred_fallthru
          _
        %s250 = sand.u32 %s31, 1
        %s251 = scalar_lea.sflag [#allocation5], %s250
        %s252 = sand.u32 %s31, 1
        %s253 = smul.addr %s252, 8
        %s254 = scalar_lea.vmem [#allocation4], %s253
        %p255 = pneg %p44
        %p256 = pneg %p41
        %p257 = pneg %p65
        %p258 = pneg %p62
        %p259 = pneg %p86
        %p260 = pneg %p83
        %p261 = pneg %p107
        %p262 = pneg %p104
        %p263 = pneg %p128
        %p264 = pneg %p125
        %p265 = pneg %p154
        %p266 = pneg %p151
        %s267 = sand.u32 %s141, 1
        %s268 = scalar_lea.sflag [#allocation6], %s267
        %s269 = sand.u32 %s141, 1
        %s270 = smul.addr %s269, 16
        %s271 = scalar_lea.vmem [#allocation10], %s270
        %s272 = smul.u32 2, %s23
        %s273 = smul.u32 2, %s23
        %vm275 = vcmask 516096
        %276 = vst.msk [vmem:[#allocation2] sm:$0x1] %vm275, 0.0
        %277 = vst.msk [vmem:[#allocation2 + $0x11] sm:$0x1] %vm275, 0.0
        %278 = vst.msk [vmem:[#allocation3] sm:$0x1] %vm275, 0.0
        %279 = vst.msk [vmem:[#allocation3 + $0x11] sm:$0x1] %vm275, 0.0
        %v280 = vld [vmem:[%s237] sm:$0xf]
        %v281 = vld [vmem:[%s237 + $0x4] sm:$0xf]
        %v282 = vunpack.c.l.bf16 %v280
        %v283 = vunpack.c.l.bf16 %v281
        %vm284 = vcmask 523264
        %285 = vst.msk [vmem:[#allocation2 + $0x1] sm:$0xff] %vm284, %v282
        %286 = vst.msk [vmem:[#allocation2 + $0x9] sm:$0xff] %vm284, %v283
        %v287 = vld [vmem:[#allocation2] sm:$0xff]
        %v288 = vld [vmem:[#allocation2 + $0x8] sm:$0xff]
        %v289 = vpack.c.bf16 %v288, %v287
        %v290 = vld [vmem:[#allocation7] sm:$0xf]
        %v291 = vld [vmem:[#allocation7 + $0x4] sm:$0xf]
        %v292 = vld [vmem:[#allocation7 + $0x8] sm:$0xf]
        %v293 = vld [vmem:[#allocation7 + $0xc] sm:$0xf]
        %v294 = vld [vmem:[#allocation7 + $0x10] sm:$0xf]
        %v295 = vld [vmem:[#allocation7 + $0x14] sm:$0xf]
        %v296 = vld [vmem:[#allocation7 + $0x18] sm:$0xf]
        %v297 = vld [vmem:[#allocation7 + $0x1c] sm:$0xf]
        %v298 = vld [vmem:[#allocation2 + $0x1] sm:$0xff]
        %v299 = vld [vmem:[#allocation2 + $0x9] sm:$0xff]
        %v300 = vpack.c.bf16 %v299, %v298
        %s301 = scalar_lea.vmem [#allocation7], 32
        %v302 = vld [vmem:[%s301] sm:$0xf]
        %v303 = vld [vmem:[%s301 + $0x4] sm:$0xf]
        %v304 = vld [vmem:[%s301 + $0x8] sm:$0xf]
        %v305 = vld [vmem:[%s301 + $0xc] sm:$0xf]
        %v306 = vld [vmem:[%s301 + $0x10] sm:$0xf]
        %v307 = vld [vmem:[%s301 + $0x14] sm:$0xf]
        %v308 = vld [vmem:[%s301 + $0x18] sm:$0xf]
        %v309 = vld [vmem:[%s301 + $0x1c] sm:$0xf]
        %v318 = vunpack.c.l.b16 %v302
        %v319 = vunpack.c.l.b16 %v303
        %v320 = vunpack.c.l.b16 %v304
        %v321 = vunpack.c.l.b16 %v305
        %v322 = vunpack.c.l.b16 %v306
        %v323 = vunpack.c.l.b16 %v307
        %v324 = vunpack.c.l.b16 %v308
        %v325 = vunpack.c.l.b16 %v309
        %v326 = vpack.c.b16 %v319, %v318
        %v327 = vpack.c.b16 %v321, %v320
        %v328 = vpack.c.b16 %v323, %v322
        %v329 = vpack.c.b16 %v325, %v324
        %v335 = vsel %vm284, %v300, 0
        %337 = vmatprep.subr.bf16.mxu0 0
        %338 = vmatpush1.bf16.msra.mxu0 0
        %339 = vmatprep.subr.bf16.mxu0 0
        %340 = vmatpush1.bf16.msra.mxu0 0
        %341 = vmatprep.subr.bf16.mxu0 0
        %342 = vmatpush1.bf16.msra.mxu0 0
        %343 = vmatprep.subr.bf16.mxu0 0
        %344 = vmatpush1.bf16.msra.mxu0 0
        %345 = vmatprep.subr.bf16.mxu0 0
        %346 = vmatpush1.bf16.msra.mxu0 %v329
        %347 = vmatprep.subr.bf16.mxu0 0
        %348 = vmatpush1.bf16.msra.mxu0 %v328
        %349 = vmatprep.subr.bf16.mxu0 0
        %350 = vmatpush1.bf16.msra.mxu0 %v327
        %351 = vmatprep.subr.bf16.mxu0 0
        %352 = vmatpush1.bf16.msra.mxu0 %v326
        %353 = vmatprep.subr.bf16.mxu0 0
        %354 = vmatpush2.bf16.msra.mxu0 0
        %355 = vmatprep.subr.bf16.mxu0 0
        %356 = vmatpush2.bf16.msra.mxu0 0
        %357 = vmatprep.subr.bf16.mxu0 0
        %358 = vmatpush2.bf16.msra.mxu0 0
        %359 = vmatprep.subr.bf16.mxu0 0
        %360 = vmatpush2.bf16.msra.mxu0 0
        %361 = vmatprep.subr.bf16.mxu0 0
        %362 = vmatpush2.bf16.msra.mxu0 0
        %363 = vmatprep.subr.bf16.mxu0 0
        %364 = vmatpush2.bf16.msra.mxu0 0
        %365 = vmatprep.subr.bf16.mxu0 0
        %366 = vmatpush2.bf16.msra.mxu0 0
        %367 = vmatprep.subr.bf16.mxu0 0
        %368 = vmatpush2.bf16.msra.mxu0 0
        %369 = vmatprep.mubr.bf16.mxu0 0
        %370 = vmatmul.mubr.bf16.gmra.mxu0 %v335
        %v371 = vpop.f32.mrf.mxu0
        %v372 = vadd.f32 0.0, %v371
        %v373 = vpop.f32.mrf.mxu0
        %v374 = vpop.f32.mrf.mxu0
        %v375 = vadd.f32 0.0, %v374
        %v376 = vpop.f32.mrf.mxu0
        %377 = vdwg.mxu0
        %v386 = vunpack.c.l.b16 %v290
        %v387 = vunpack.c.l.b16 %v291
        %v388 = vunpack.c.l.b16 %v292
        %v389 = vunpack.c.l.b16 %v293
        %v390 = vunpack.c.l.b16 %v294
        %v391 = vunpack.c.l.b16 %v295
        %v392 = vunpack.c.l.b16 %v296
        %v393 = vunpack.c.l.b16 %v297
        %v394 = vpack.c.b16 %v387, %v386
        %v395 = vpack.c.b16 %v389, %v388
        %v396 = vpack.c.b16 %v391, %v390
        %v397 = vpack.c.b16 %v393, %v392
        %v403 = vsel %vm284, %v289, 0
        %405 = vmatprep.subr.bf16.mxu0 0
        %406 = vmatpush1.bf16.msra.mxu0 0
        %407 = vmatprep.subr.bf16.mxu0 0
        %408 = vmatpush1.bf16.msra.mxu0 0
        %409 = vmatprep.subr.bf16.mxu0 0
        %410 = vmatpush1.bf16.msra.mxu0 0
        %411 = vmatprep.subr.bf16.mxu0 0
        %412 = vmatpush1.bf16.msra.mxu0 0
        %413 = vmatprep.subr.bf16.mxu0 0
        %414 = vmatpush1.bf16.msra.mxu0 %v397
        %415 = vmatprep.subr.bf16.mxu0 0
        %416 = vmatpush1.bf16.msra.mxu0 %v396
        %417 = vmatprep.subr.bf16.mxu0 0
        %418 = vmatpush1.bf16.msra.mxu0 %v395
        %419 = vmatprep.subr.bf16.mxu0 0
        %420 = vmatpush1.bf16.msra.mxu0 %v394
        %421 = vmatprep.subr.bf16.mxu0 0
        %422 = vmatpush2.bf16.msra.mxu0 0
        %423 = vmatprep.subr.bf16.mxu0 0
        %424 = vmatpush2.bf16.msra.mxu0 0
        %425 = vmatprep.subr.bf16.mxu0 0
        %426 = vmatpush2.bf16.msra.mxu0 0
        %427 = vmatprep.subr.bf16.mxu0 0
        %428 = vmatpush2.bf16.msra.mxu0 0
        %429 = vmatprep.subr.bf16.mxu0 0
        %430 = vmatpush2.bf16.msra.mxu0 0
        %431 = vmatprep.subr.bf16.mxu0 0
        %432 = vmatpush2.bf16.msra.mxu0 0
        %433 = vmatprep.subr.bf16.mxu0 0
        %434 = vmatpush2.bf16.msra.mxu0 0
        %435 = vmatprep.subr.bf16.mxu0 0
        %436 = vmatpush2.bf16.msra.mxu0 0
        %437 = vmatprep.mubr.bf16.mxu0 0
        %438 = vmatmul.mubr.bf16.gmra.mxu0 %v403
        %v439 = vpop.f32.mrf.mxu0
        %v440 = vadd.f32 %v372, %v439
        %v441 = vpop.f32.mrf.mxu0
        %v442 = vpop.f32.mrf.mxu0
        %v443 = vadd.f32 %v375, %v442
        %v444 = vpop.f32.mrf.mxu0
        %445 = vdwg.mxu0
        %v446 = vld [vmem:[#allocation2 + $0x2] sm:$0xff]
        %v447 = vld [vmem:[#allocation2 + $0xa] sm:$0xff]
        %v448 = vpack.c.bf16 %v447, %v446
        %s449 = scalar_lea.vmem [#allocation7], 64
        %v450 = vld [vmem:[%s449] sm:$0xf]
        %v451 = vld [vmem:[%s449 + $0x4] sm:$0xf]
        %v452 = vld [vmem:[%s449 + $0x8] sm:$0xf]
        %v453 = vld [vmem:[%s449 + $0xc] sm:$0xf]
        %v454 = vld [vmem:[%s449 + $0x10] sm:$0xf]
        %v455 = vld [vmem:[%s449 + $0x14] sm:$0xf]
        %v456 = vld [vmem:[%s449 + $0x18] sm:$0xf]
        %v457 = vld [vmem:[%s449 + $0x1c] sm:$0xf]
        %v466 = vunpack.c.l.b16 %v450
        %v467 = vunpack.c.l.b16 %v451
        %v468 = vunpack.c.l.b16 %v452
        %v469 = vunpack.c.l.b16 %v453
        %v470 = vunpack.c.l.b16 %v454
        %v471 = vunpack.c.l.b16 %v455
        %v472 = vunpack.c.l.b16 %v456
        %v473 = vunpack.c.l.b16 %v457
        %v474 = vpack.c.b16 %v467, %v466
        %v475 = vpack.c.b16 %v469, %v468
        %v476 = vpack.c.b16 %v471, %v470
        %v477 = vpack.c.b16 %v473, %v472
        %v483 = vsel %vm284, %v448, 0
        %485 = vmatprep.subr.bf16.mxu0 0
        %486 = vmatpush1.bf16.msra.mxu0 0
        %487 = vmatprep.subr.bf16.mxu0 0
        %488 = vmatpush1.bf16.msra.mxu0 0
        %489 = vmatprep.subr.bf16.mxu0 0
        %490 = vmatpush1.bf16.msra.mxu0 0
        %491 = vmatprep.subr.bf16.mxu0 0
        %492 = vmatpush1.bf16.msra.mxu0 0
        %493 = vmatprep.subr.bf16.mxu0 0
        %494 = vmatpush1.bf16.msra.mxu0 %v477
        %495 = vmatprep.subr.bf16.mxu0 0
        %496 = vmatpush1.bf16.msra.mxu0 %v476
        %497 = vmatprep.subr.bf16.mxu0 0
        %498 = vmatpush1.bf16.msra.mxu0 %v475
        %499 = vmatprep.subr.bf16.mxu0 0
        %500 = vmatpush1.bf16.msra.mxu0 %v474
        %501 = vmatprep.subr.bf16.mxu0 0
        %502 = vmatpush2.bf16.msra.mxu0 0
        %503 = vmatprep.subr.bf16.mxu0 0
        %504 = vmatpush2.bf16.msra.mxu0 0
        %505 = vmatprep.subr.bf16.mxu0 0
        %506 = vmatpush2.bf16.msra.mxu0 0
        %507 = vmatprep.subr.bf16.mxu0 0
        %508 = vmatpush2.bf16.msra.mxu0 0
        %509 = vmatprep.subr.bf16.mxu0 0
        %510 = vmatpush2.bf16.msra.mxu0 0
        %511 = vmatprep.subr.bf16.mxu0 0
        %512 = vmatpush2.bf16.msra.mxu0 0
        %513 = vmatprep.subr.bf16.mxu0 0
        %514 = vmatpush2.bf16.msra.mxu0 0
        %515 = vmatprep.subr.bf16.mxu0 0
        %516 = vmatpush2.bf16.msra.mxu0 0
        %517 = vmatprep.mubr.bf16.mxu0 0
        %518 = vmatmul.mubr.bf16.gmra.mxu0 %v483
        %v519 = vpop.f32.mrf.mxu0
        %v520 = vadd.f32 0.0, %v519
        %v521 = vpop.f32.mrf.mxu0
        %v522 = vpop.f32.mrf.mxu0
        %v523 = vadd.f32 0.0, %v522
        %v524 = vpop.f32.mrf.mxu0
        %525 = vdwg.mxu0
        %v526 = vadd.f32 %v440, %v520
        %v527 = vadd.f32 %v443, %v523
        %v528 = vld [vmem:[%s2] sm:$0x1]
        %v530 = vlaneseq
        %v531 = vshrl.u32 %v530, 7
        %v532 = vsub.s32 0, %v531
        %v533 = vrot.slane %v528, %v532
        %v535 = vadd.f32 %v526, %v533
        %v536 = vadd.f32 %v527, %v533
        %v537 = vmax.f32 %v535, 0.0
        %v538 = vmax.f32 %v536, 0.0
        %539 = vst.msk [vmem:[#allocation3 + $0x1] sm:$0xff] %vm284, %v537
        %540 = vst.msk [vmem:[#allocation3 + $0x9] sm:$0xff] %vm284, %v538
        %v541 = vld [vmem:[#allocation3] sm:$0xff]
        %v542 = vld [vmem:[#allocation3 + $0x8] sm:$0xff]
        %v543 = vpack.c.bf16 %v542, %v541
        %v544 = vld [vmem:[#allocation9] sm:$0xf]
        %v545 = vld [vmem:[#allocation9 + $0x4] sm:$0xf]
        %v546 = vld [vmem:[#allocation9 + $0x8] sm:$0xf]
        %v547 = vld [vmem:[#allocation9 + $0xc] sm:$0xf]
        %v548 = vld [vmem:[#allocation9 + $0x10] sm:$0xf]
        %v549 = vld [vmem:[#allocation9 + $0x14] sm:$0xf]
        %v550 = vld [vmem:[#allocation9 + $0x18] sm:$0xf]
        %v551 = vld [vmem:[#allocation9 + $0x1c] sm:$0xf]
        %v552 = vld [vmem:[#allocation3 + $0x1] sm:$0xff]
        %v553 = vld [vmem:[#allocation3 + $0x9] sm:$0xff]
        %v554 = vpack.c.bf16 %v553, %v552
        %s555 = scalar_lea.vmem [#allocation9], 32
        %v556 = vld [vmem:[%s555] sm:$0xf]
        %v557 = vld [vmem:[%s555 + $0x4] sm:$0xf]
        %v558 = vld [vmem:[%s555 + $0x8] sm:$0xf]
        %v559 = vld [vmem:[%s555 + $0xc] sm:$0xf]
        %v560 = vld [vmem:[%s555 + $0x10] sm:$0xf]
        %v561 = vld [vmem:[%s555 + $0x14] sm:$0xf]
        %v562 = vld [vmem:[%s555 + $0x18] sm:$0xf]
        %v563 = vld [vmem:[%s555 + $0x1c] sm:$0xf]
        %v572 = vunpack.c.l.b16 %v556
        %v573 = vunpack.c.l.b16 %v557
        %v574 = vunpack.c.l.b16 %v558
        %v575 = vunpack.c.l.b16 %v559
        %v576 = vunpack.c.l.b16 %v560
        %v577 = vunpack.c.l.b16 %v561
        %v578 = vunpack.c.l.b16 %v562
        %v579 = vunpack.c.l.b16 %v563
        %v580 = vpack.c.b16 %v573, %v572
        %v581 = vpack.c.b16 %v575, %v574
        %v582 = vpack.c.b16 %v577, %v576
        %v583 = vpack.c.b16 %v579, %v578
        %v589 = vsel %vm284, %v554, 0
        %591 = vmatprep.subr.bf16.mxu0 0
        %592 = vmatpush1.bf16.msra.mxu0 0
        %593 = vmatprep.subr.bf16.mxu0 0
        %594 = vmatpush1.bf16.msra.mxu0 0
        %595 = vmatprep.subr.bf16.mxu0 0
        %596 = vmatpush1.bf16.msra.mxu0 0
        %597 = vmatprep.subr.bf16.mxu0 0
        %598 = vmatpush1.bf16.msra.mxu0 0
        %599 = vmatprep.subr.bf16.mxu0 0
        %600 = vmatpush1.bf16.msra.mxu0 %v583
        %601 = vmatprep.subr.bf16.mxu0 0
        %602 = vmatpush1.bf16.msra.mxu0 %v582
        %603 = vmatprep.subr.bf16.mxu0 0
        %604 = vmatpush1.bf16.msra.mxu0 %v581
        %605 = vmatprep.subr.bf16.mxu0 0
        %606 = vmatpush1.bf16.msra.mxu0 %v580
        %607 = vmatprep.subr.bf16.mxu0 0
        %608 = vmatpush2.bf16.msra.mxu0 0
        %609 = vmatprep.subr.bf16.mxu0 0
        %610 = vmatpush2.bf16.msra.mxu0 0
        %611 = vmatprep.subr.bf16.mxu0 0
        %612 = vmatpush2.bf16.msra.mxu0 0
        %613 = vmatprep.subr.bf16.mxu0 0
        %614 = vmatpush2.bf16.msra.mxu0 0
        %615 = vmatprep.subr.bf16.mxu0 0
        %616 = vmatpush2.bf16.msra.mxu0 0
        %617 = vmatprep.subr.bf16.mxu0 0
        %618 = vmatpush2.bf16.msra.mxu0 0
        %619 = vmatprep.subr.bf16.mxu0 0
        %620 = vmatpush2.bf16.msra.mxu0 0
        %621 = vmatprep.subr.bf16.mxu0 0
        %622 = vmatpush2.bf16.msra.mxu0 0
        %623 = vmatprep.mubr.bf16.mxu0 0
        %624 = vmatmul.mubr.bf16.gmra.mxu0 %v589
        %v625 = vpop.f32.mrf.mxu0
        %v626 = vadd.f32 0.0, %v625
        %v627 = vpop.f32.mrf.mxu0
        %v628 = vpop.f32.mrf.mxu0
        %v629 = vadd.f32 0.0, %v628
        %v630 = vpop.f32.mrf.mxu0
        %631 = vdwg.mxu0
        %v640 = vunpack.c.l.b16 %v544
        %v641 = vunpack.c.l.b16 %v545
        %v642 = vunpack.c.l.b16 %v546
        %v643 = vunpack.c.l.b16 %v547
        %v644 = vunpack.c.l.b16 %v548
        %v645 = vunpack.c.l.b16 %v549
        %v646 = vunpack.c.l.b16 %v550
        %v647 = vunpack.c.l.b16 %v551
        %v648 = vpack.c.b16 %v641, %v640
        %v649 = vpack.c.b16 %v643, %v642
        %v650 = vpack.c.b16 %v645, %v644
        %v651 = vpack.c.b16 %v647, %v646
        %v657 = vsel %vm284, %v543, 0
        %659 = vmatprep.subr.bf16.mxu0 0
        %660 = vmatpush1.bf16.msra.mxu0 0
        %661 = vmatprep.subr.bf16.mxu0 0
        %662 = vmatpush1.bf16.msra.mxu0 0
        %663 = vmatprep.subr.bf16.mxu0 0
        %664 = vmatpush1.bf16.msra.mxu0 0
        %665 = vmatprep.subr.bf16.mxu0 0
        %666 = vmatpush1.bf16.msra.mxu0 0
        %667 = vmatprep.subr.bf16.mxu0 0
        %668 = vmatpush1.bf16.msra.mxu0 %v651
        %669 = vmatprep.subr.bf16.mxu0 0
        %670 = vmatpush1.bf16.msra.mxu0 %v650
        %671 = vmatprep.subr.bf16.mxu0 0
        %672 = vmatpush1.bf16.msra.mxu0 %v649
        %673 = vmatprep.subr.bf16.mxu0 0
        %674 = vmatpush1.bf16.msra.mxu0 %v648
        %675 = vmatprep.subr.bf16.mxu0 0
        %676 = vmatpush2.bf16.msra.mxu0 0
        %677 = vmatprep.subr.bf16.mxu0 0
        %678 = vmatpush2.bf16.msra.mxu0 0
        %679 = vmatprep.subr.bf16.mxu0 0
        %680 = vmatpush2.bf16.msra.mxu0 0
        %681 = vmatprep.subr.bf16.mxu0 0
        %682 = vmatpush2.bf16.msra.mxu0 0
        %683 = vmatprep.subr.bf16.mxu0 0
        %684 = vmatpush2.bf16.msra.mxu0 0
        %685 = vmatprep.subr.bf16.mxu0 0
        %686 = vmatpush2.bf16.msra.mxu0 0
        %687 = vmatprep.subr.bf16.mxu0 0
        %688 = vmatpush2.bf16.msra.mxu0 0
        %689 = vmatprep.subr.bf16.mxu0 0
        %690 = vmatpush2.bf16.msra.mxu0 0
        %691 = vmatprep.mubr.bf16.mxu0 0
        %692 = vmatmul.mubr.bf16.gmra.mxu0 %v657
        %v693 = vpop.f32.mrf.mxu0
        %v694 = vadd.f32 %v626, %v693
        %v695 = vpop.f32.mrf.mxu0
        %v696 = vpop.f32.mrf.mxu0
        %v697 = vadd.f32 %v629, %v696
        %v698 = vpop.f32.mrf.mxu0
        %699 = vdwg.mxu0
        %v700 = vld [vmem:[#allocation3 + $0x2] sm:$0xff]
        %v701 = vld [vmem:[#allocation3 + $0xa] sm:$0xff]
        %v702 = vpack.c.bf16 %v701, %v700
        %s703 = scalar_lea.vmem [#allocation9], 64
        %v704 = vld [vmem:[%s703] sm:$0xf]
        %v705 = vld [vmem:[%s703 + $0x4] sm:$0xf]
        %v706 = vld [vmem:[%s703 + $0x8] sm:$0xf]
        %v707 = vld [vmem:[%s703 + $0xc] sm:$0xf]
        %v708 = vld [vmem:[%s703 + $0x10] sm:$0xf]
        %v709 = vld [vmem:[%s703 + $0x14] sm:$0xf]
        %v710 = vld [vmem:[%s703 + $0x18] sm:$0xf]
        %v711 = vld [vmem:[%s703 + $0x1c] sm:$0xf]
        %v720 = vunpack.c.l.b16 %v704
        %v721 = vunpack.c.l.b16 %v705
        %v722 = vunpack.c.l.b16 %v706
        %v723 = vunpack.c.l.b16 %v707
        %v724 = vunpack.c.l.b16 %v708
        %v725 = vunpack.c.l.b16 %v709
        %v726 = vunpack.c.l.b16 %v710
        %v727 = vunpack.c.l.b16 %v711
        %v728 = vpack.c.b16 %v721, %v720
        %v729 = vpack.c.b16 %v723, %v722
        %v730 = vpack.c.b16 %v725, %v724
        %v731 = vpack.c.b16 %v727, %v726
        %v737 = vsel %vm284, %v702, 0
        %739 = vmatprep.subr.bf16.mxu0 0
        %740 = vmatpush1.bf16.msra.mxu0 0
        %741 = vmatprep.subr.bf16.mxu0 0
        %742 = vmatpush1.bf16.msra.mxu0 0
        %743 = vmatprep.subr.bf16.mxu0 0
        %744 = vmatpush1.bf16.msra.mxu0 0
        %745 = vmatprep.subr.bf16.mxu0 0
        %746 = vmatpush1.bf16.msra.mxu0 0
        %747 = vmatprep.subr.bf16.mxu0 0
        %748 = vmatpush1.bf16.msra.mxu0 %v731
        %749 = vmatprep.subr.bf16.mxu0 0
        %750 = vmatpush1.bf16.msra.mxu0 %v730
        %751 = vmatprep.subr.bf16.mxu0 0
        %752 = vmatpush1.bf16.msra.mxu0 %v729
        %753 = vmatprep.subr.bf16.mxu0 0
        %754 = vmatpush1.bf16.msra.mxu0 %v728
        %755 = vmatprep.subr.bf16.mxu0 0
        %756 = vmatpush2.bf16.msra.mxu0 0
        %757 = vmatprep.subr.bf16.mxu0 0
        %758 = vmatpush2.bf16.msra.mxu0 0
        %759 = vmatprep.subr.bf16.mxu0 0
        %760 = vmatpush2.bf16.msra.mxu0 0
        %761 = vmatprep.subr.bf16.mxu0 0
        %762 = vmatpush2.bf16.msra.mxu0 0
        %763 = vmatprep.subr.bf16.mxu0 0
        %764 = vmatpush2.bf16.msra.mxu0 0
        %765 = vmatprep.subr.bf16.mxu0 0
        %766 = vmatpush2.bf16.msra.mxu0 0
        %767 = vmatprep.subr.bf16.mxu0 0
        %768 = vmatpush2.bf16.msra.mxu0 0
        %769 = vmatprep.subr.bf16.mxu0 0
        %770 = vmatpush2.bf16.msra.mxu0 0
        %771 = vmatprep.mubr.bf16.mxu0 0
        %772 = vmatmul.mubr.bf16.gmra.mxu0 %v737
        %v773 = vpop.f32.mrf.mxu0
        %v774 = vadd.f32 0.0, %v773
        %v775 = vpop.f32.mrf.mxu0
        %v776 = vpop.f32.mrf.mxu0
        %v777 = vadd.f32 0.0, %v776
        %v778 = vpop.f32.mrf.mxu0
        %779 = vdwg.mxu0
        %v780 = vadd.f32 %v694, %v774
        %v781 = vadd.f32 %v697, %v777
        %v782 = vld [vmem:[#allocation2 + $0x1] sm:$0xff]
        %v783 = vld [vmem:[#allocation2 + $0x9] sm:$0xff]
        %v784 = vld [vmem:[%s4] sm:$0x1]
        %v786 = vlaneseq
        %v787 = vshrl.u32 %v786, 7
        %v788 = vsub.s32 0, %v787
        %v789 = vrot.slane %v784, %v788
        %v791 = vadd.f32 %v780, %v789
        %v792 = vadd.f32 %v781, %v789
        %v793 = vadd.f32 %v791, %v782
        %v794 = vadd.f32 %v792, %v783
        %v795 = vmax.f32 %v793, 0.0
        %v796 = vmax.f32 %v794, 0.0
        %797 = vst.msk [vmem:[%s271] sm:$0xff] %vm284, %v795
        %798 = vst.msk [vmem:[%s271 + $0x8] sm:$0xff] %vm284, %v796
        %s799 = sand.u32 %s141, 1
        %s800 = scalar_lea.sflag [#allocation6], %s799
        %s801 = sand.u32 %s141, 1
        %s802 = smul.addr %s801, 16
        %s803 = scalar_lea.vmem [#allocation10], %s802
        // Predicated region
        $region53: #{tpu_custom_call.1} parent=39 // pred_check
          %p804 = pneg %p151
        $region54: #{tpu_custom_call.1} parent=39 // pred_check_branch
          %806 = sbr.rel (%p804) target = $region56
        $region55: #{tpu_custom_call.1} parent=39 // pred_region
          %s807 = smul.u32 2, %s23
          %s809 = ssub.s32 256, 256
          %810 = vsyncadd %s800, %s809
          %s811 = smul.addr %s807, 128
          %s812 = scalar_lea.hbm %s5, %s811
          %s813 = sshll.u32 %s803, 4
          %s814 = int_to_ptr.vmem [resolvable:$true] %s813
          %819 = dma.vmem_to_hbm [thread:$0]  %s814, 256, %s812, %s800, 128, 128, 8
        $region56: #{tpu_custom_call.1} parent=39 // pred_fallthru
          _
      $region40: #{tpu_custom_call.1} parent=5 // pred_fallthru
        _
      %p820 = scmp.le.s32.totalorder 2, %s18
      // Predicated region
      $region57: #{tpu_custom_call.1} parent=5 // pred_check
        %p821 = pneg %p820
      $region58: #{tpu_custom_call.1} parent=5 // pred_check_branch
        %823 = sbr.rel (%p821) target = $region60
      $region59: #{tpu_custom_call.1} parent=5 // pred_region
        %s824 = ssub.s32 %s18, 2
        // Predicated region
        $region61: #{tpu_custom_call.1} parent=59 // pred_check
          %p825 = pneg %p157
        $region62: #{tpu_custom_call.1} parent=59 // pred_check_branch
          %827 = sbr.rel (%p825) target = $region64
        $region63: #{tpu_custom_call.1} parent=59 // pred_region
          %s828 = sand.u32 %s142, 1
          %s829 = scalar_lea.sflag [#allocation6], %s828
          %s830 = sand.u32 %s142, 1
          %s831 = smul.addr %s830, 16
          %s832 = scalar_lea.vmem [#allocation10], %s831
          %833 = dma.done %s829, 256
        $region64: #{tpu_custom_call.1} parent=59 // pred_fallthru
          _
      $region60: #{tpu_custom_call.1} parent=5 // pred_fallthru
        _
    $region6: #{tpu_custom_call.1} parent=1 // loop_footer
      %s22 = sadd.s32 1, %s18
    $region7: #{tpu_custom_call.1} parent=1 // loop_footer_branch
      %17 = sbr.rel target = $region3
    $region8: #{tpu_custom_call.1} parent=1 // loop_exit
      _
    %834 = vsyncpa [#allocation5], 1
    %s835 = scalar_lea.sflag [#allocation5], 1
    %836 = vsyncpa %s835, 1
    %837 = vsyncpa [#allocation8], 1
    %838 = vsyncpa [#allocation6], 1
    %s839 = scalar_lea.sflag [#allocation6], 1
    %840 = vsyncpa %s839, 1

</llo_original>
